<compile_context>
chip_gen: v7x
topology: tpu7x:2x2x1
jax: 0.10.0
libtpu: 0.0.40
codegen_flags: <defaults>
</compile_context>

<pallas_src>
import functools

import jax
import jax.numpy as jnp
from jax.experimental import pallas as pl
from jax.experimental.pallas import tpu as pltpu


def _round_up(x, m):
    return ((x + m - 1) // m) * m


def _make_fused_kernel(num_layers):
    """Kernel: refs = (x, w0, b0, w1, b1, ..., out).

    x:   (C_in, TM)      activations tile, spatial on lanes
    w_l: (C_out_l, C_in_l) BN-folded weight
    b_l: (C_out_l, 1)      BN shift
    out: (C_last, TM)
    """
    def kernel(*refs):
        x_ref = refs[0]
        o_ref = refs[-1]
        prm = refs[1:-1]
        y = x_ref[...].astype(jnp.float32)
        for l in range(num_layers):
            w = prm[2 * l][...]
            b = prm[2 * l + 1][...]
            y = jnp.dot(w, y, preferred_element_type=jnp.float32)
            y = jnp.maximum(y + b, 0.0)
        o_ref[...] = y.astype(o_ref.dtype)
    return kernel


def init_params(key, input_channels, mlp_channels):
    """Parameters matching nn.Conv2d(c_in, c_out, 1, bias=False) +
    nn.BatchNorm2d(c_out, eps=1e-3) (evaluated with running stats)."""
    chans = [input_channels] + list(mlp_channels)
    params = []
    for i in range(len(chans) - 1):
        c_in, c_out = chans[i], chans[i + 1]
        key, wk = jax.random.split(key)
        w = jax.random.normal(wk, (c_out, c_in, 1, 1), jnp.float32) * 0.1
        params.append(dict(
            w=w,
            gamma=jnp.ones((c_out,), jnp.float32),
            beta=jnp.zeros((c_out,), jnp.float32),
            mean=jnp.zeros((c_out,), jnp.float32),
            var=jnp.ones((c_out,), jnp.float32),
        ))
    return params


@functools.partial(jax.jit, static_argnames=("target_tm",))
def base_mlp_backbone_forward(spatial_features, params, *, target_tm=1024):
    """Forward pass of BaseMLPBackbone.

    spatial_features: (N, C, H, W) float32 (NCHW, as in PyTorch)
    Returns spatial_features_2d: (N, C_last, H, W) float32
    """
    eps = 1e-3
    N, C, H, W = spatial_features.shape
    HW = H * W
    x = spatial_features.reshape(N, C, HW)      # free reshape, no data movement

    # Fold BN (inference, running stats) into conv weights / shifts.
    ws, bs = [], []
    for layer in params:
        w = layer["w"][:, :, 0, 0]                           # (c_out, c_in)
        scale = layer["gamma"] * jax.lax.rsqrt(layer["var"] + eps)
        ws.append(w * scale[:, None])                        # (c_out, c_in)
        bs.append((layer["beta"] - layer["mean"] * scale)[:, None])  # (c_out, 1)
    num_layers = len(ws)
    c_last = ws[-1].shape[0]

    # Spatial tile: multiple of 128 lanes, as large as sensible, capped to the
    # (rounded) spatial extent; keep >= 2 total parallel grid steps so both
    # v7x TensorCores get work.
    tm = min(int(target_tm), _round_up(HW, 128))
    tm = max(128, (tm // 128) * 128)
    if N * ((HW + tm - 1) // tm) < 2:
        tm = max(128, _round_up((HW + 1) // 2, 128))

    hwp = _round_up(HW, tm)
    if hwp != HW:
        # Single pad; padded columns are sliced off below.
        x = jnp.pad(x, ((0, 0), (0, 0), (0, hwp - HW)))

    grid = (N, hwp // tm)

    in_specs = [pl.BlockSpec((None, C, tm), lambda n, i: (n, 0, i))]
    for l in range(num_layers):
        co, ci = ws[l].shape
        in_specs.append(pl.BlockSpec((co, ci), lambda n, i: (0, 0)))
        in_specs.append(pl.BlockSpec((co, 1), lambda n, i: (0, 0)))
    out_spec = pl.BlockSpec((None, c_last, tm), lambda n, i: (n, 0, i))

    flops = 2 * N * hwp * sum(w.shape[0] * w.shape[1] for w in ws)
    bytes_accessed = 4 * (N * hwp * (C + c_last)
                          + sum(w.size for w in ws) + sum(b.size for b in bs))

    flat_params = [p for pair in zip(ws, bs) for p in pair]

    out = pl.pallas_call(
        _make_fused_kernel(num_layers),
        out_shape=jax.ShapeDtypeStruct((N, c_last, hwp), jnp.float32),
        grid_spec=pltpu.PrefetchScalarGridSpec(
            num_scalar_prefetch=0,
            grid=grid,
            in_specs=in_specs,
            out_specs=out_spec,
        ),
        compiler_params=pltpu.CompilerParams(
            dimension_semantics=("parallel", "parallel")),
        cost_estimate=pl.CostEstimate(
            flops=flops, transcendentals=0, bytes_accessed=bytes_accessed),
    )(x, *flat_params)

    if hwp != HW:
        out = out[:, :, :HW]
    return out.reshape(N, c_last, H, W)


if __name__ == "__main__":
    # Small config: input_channels=4, MLP_CHANNELS=[32, 64]
    N, C_in, H, W = 2, 4, 16, 16
    mlp_channels = [32, 64]

    key = jax.random.PRNGKey(0)
    key, xk = jax.random.split(key)
    spatial_features = jax.random.normal(xk, (N, C_in, H, W), jnp.float32)

    params = init_params(key, C_in, mlp_channels)

    out = base_mlp_backbone_forward(spatial_features, params)
    out = jax.block_until_ready(out)

    # Pure-JAX reference (same semantics as the PyTorch module in eval mode).
    x_ref = spatial_features
    eps = 1e-3
    for layer in params:
        w = layer["w"][:, :, 0, 0]
        y = jnp.einsum("nchw,oc->nohw", x_ref, w)
        scale = (layer["gamma"] / jnp.sqrt(layer["var"] + eps)).reshape(1, -1, 1, 1)
        shift = (layer["beta"] - layer["mean"] *
                 (layer["gamma"] / jnp.sqrt(layer["var"] + eps))).reshape(1, -1, 1, 1)
        x_ref = jnp.maximum(y * scale + shift, 0.0)

    assert out.shape == (N, mlp_channels[-1], H, W), out.shape
    assert jnp.allclose(out, x_ref, atol=1e-4, rtol=1e-4), (
        float(jnp.max(jnp.abs(out - x_ref))))
    print("KERNEL_OK")
</pallas_src>

<mosaic_0001>
module attributes {stable_mosaic.version = 11 : i64} {
  func.func @kernel(%arg0: i32, %arg1: i32, %arg2: memref<1x4x256xf32, #tpu.memory_space<vmem>>, %arg3: memref<32x4xf32, #tpu.memory_space<vmem>>, %arg4: memref<32x1xf32, #tpu.memory_space<vmem>>, %arg5: memref<64x32xf32, #tpu.memory_space<vmem>>, %arg6: memref<64x1xf32, #tpu.memory_space<vmem>>, %arg7: memref<1x64x256xf32, #tpu.memory_space<vmem>>) attributes {dimension_semantics = [#tpu.dimension_semantics<parallel>, #tpu.dimension_semantics<parallel>], iteration_bounds = array<i64: 2, 1>, scalar_prefetch = 0 : i64, scratch_operands = 0 : i64, tpu.core_type = #tpu.core_type<tc>, window_params = [{transform_indices = @transform_0, window_bounds = array<i64: 1, 4, 256>}, {pipeline_mode = #tpu.pipeline_mode<synchronous>, transform_indices = @transform_1, window_bounds = array<i64: 32, 4>}, {pipeline_mode = #tpu.pipeline_mode<synchronous>, transform_indices = @transform_2, window_bounds = array<i64: 32, 1>}, {pipeline_mode = #tpu.pipeline_mode<synchronous>, transform_indices = @transform_3, window_bounds = array<i64: 64, 32>}, {pipeline_mode = #tpu.pipeline_mode<synchronous>, transform_indices = @transform_4, window_bounds = array<i64: 64, 1>}, {transform_indices = @transform_5, window_bounds = array<i64: 1, 64, 256>}]} {
    %c0 = arith.constant 0 : index
    %c0_0 = arith.constant 0 : index
    %c0_1 = arith.constant 0 : index
    %0 = vector.load %arg2[%c0, %c0_0, %c0_1] : memref<1x4x256xf32, #tpu.memory_space<vmem>>, vector<1x4x256xf32>
    %1 = vector.shape_cast %0 : vector<1x4x256xf32> to vector<4x256xf32>
    %c0_2 = arith.constant 0 : index
    %c0_3 = arith.constant 0 : index
    %2 = vector.load %arg3[%c0_2, %c0_3] : memref<32x4xf32, #tpu.memory_space<vmem>>, vector<32x4xf32>
    %c0_4 = arith.constant 0 : index
    %c0_5 = arith.constant 0 : index
    %3 = vector.load %arg4[%c0_4, %c0_5] : memref<32x1xf32, #tpu.memory_space<vmem>>, vector<32x1xf32>
    %cst = arith.constant dense<0.000000e+00> : vector<32x256xf32>
    %4 = tpu.matmul %2, %1, %cst {dimension_numbers = #tpu.dot_dimension_numbers<[1], [0], [0], [1], [0, 0, 1, 1], [], []>} : vector<32x4xf32>, vector<4x256xf32>, vector<32x256xf32> -> vector<32x256xf32>
    %5 = vector.broadcast %3 : vector<32x1xf32> to vector<32x256xf32>
    %6 = arith.addf %4, %5 : vector<32x256xf32>
    %cst_6 = arith.constant 0.000000e+00 : f32
    %7 = vector.broadcast %cst_6 : f32 to vector<32x256xf32>
    %8 = arith.maximumf %6, %7 : vector<32x256xf32>
    %c0_7 = arith.constant 0 : index
    %c0_8 = arith.constant 0 : index
    %9 = vector.load %arg5[%c0_7, %c0_8] : memref<64x32xf32, #tpu.memory_space<vmem>>, vector<64x32xf32>
    %c0_9 = arith.constant 0 : index
    %c0_10 = arith.constant 0 : index
    %10 = vector.load %arg6[%c0_9, %c0_10] : memref<64x1xf32, #tpu.memory_space<vmem>>, vector<64x1xf32>
    %cst_11 = arith.constant dense<0.000000e+00> : vector<64x256xf32>
    %11 = tpu.matmul %9, %8, %cst_11 {dimension_numbers = #tpu.dot_dimension_numbers<[1], [0], [0], [1], [0, 0, 1, 1], [], []>} : vector<64x32xf32>, vector<32x256xf32>, vector<64x256xf32> -> vector<64x256xf32>
    %12 = vector.broadcast %10 : vector<64x1xf32> to vector<64x256xf32>
    %13 = arith.addf %11, %12 : vector<64x256xf32>
    %cst_12 = arith.constant 0.000000e+00 : f32
    %14 = vector.broadcast %cst_12 : f32 to vector<64x256xf32>
    %15 = arith.maximumf %13, %14 : vector<64x256xf32>
    %c0_13 = arith.constant 0 : index
    %c0_14 = arith.constant 0 : index
    %c0_15 = arith.constant 0 : index
    %16 = vector.load %arg7[%c0_13, %c0_14, %c0_15] : memref<1x64x256xf32, #tpu.memory_space<vmem>>, vector<1x64x256xf32>
    %17 = vector.shape_cast %16 : vector<1x64x256xf32> to vector<64x256xf32>
    %18 = vector.shape_cast %15 : vector<64x256xf32> to vector<1x64x256xf32>
    tpu.vector_store %arg7[%c0_13, %c0_14, %c0_15], %18 {strides = array<i32>} : memref<1x64x256xf32, #tpu.memory_space<vmem>>, vector<1x64x256xf32>,
    return
  }
  func.func @transform_0(%arg0: i32, %arg1: i32) -> (i32, i32, i32) {
    %c0_i32 = arith.constant 0 : i32
    %c0_i32_0 = arith.constant 0 : i32
    return %arg0, %c0_i32, %arg1 : i32, i32, i32
  }
  func.func @transform_1(%arg0: i32, %arg1: i32) -> (i32, i32) {
    %c0_i32 = arith.constant 0 : i32
    %c0_i32_0 = arith.constant 0 : i32
    %c0_i32_1 = arith.constant 0 : i32
    return %c0_i32, %c0_i32_0 : i32, i32
  }
  func.func @transform_2(%arg0: i32, %arg1: i32) -> (i32, i32) {
    %c0_i32 = arith.constant 0 : i32
    %c0_i32_0 = arith.constant 0 : i32
    %c0_i32_1 = arith.constant 0 : i32
    return %c0_i32, %c0_i32_0 : i32, i32
  }
  func.func @transform_3(%arg0: i32, %arg1: i32) -> (i32, i32) {
    %c0_i32 = arith.constant 0 : i32
    %c0_i32_0 = arith.constant 0 : i32
    %c0_i32_1 = arith.constant 0 : i32
    return %c0_i32, %c0_i32_0 : i32, i32
  }
  func.func @transform_4(%arg0: i32, %arg1: i32) -> (i32, i32) {
    %c0_i32 = arith.constant 0 : i32
    %c0_i32_0 = arith.constant 0 : i32
    %c0_i32_1 = arith.constant 0 : i32
    return %c0_i32, %c0_i32_0 : i32, i32
  }
  func.func @transform_5(%arg0: i32, %arg1: i32) -> (i32, i32, i32) {
    %c0_i32 = arith.constant 0 : i32
    %c0_i32_0 = arith.constant 0 : i32
    return %arg0, %c0_i32, %arg1 : i32, i32, i32
  }
}

</mosaic_0001>

<llo_original>
// kernel: base_mlp_backbone_forward.1
$region0: #{base_mlp_backbone_forward.1}
  #allocation0 [shape = 'u32[]', space=smem, size = 0x4, offset = 0x4, fixed_abs, tag = 'smem constant byte address 0x4 - core index']
  #allocation1 [shape = 'u32[144,128]{1,0:T(1,128)}', space=vmem, size = 0x12000, scoped, tag = 'internal scratch']
  %s0 = inlined_call_operand.vmem [shape: f32[2,4,256], index: 0, kind: input, shape index: {}]
  %s1 = inlined_call_operand.vmem [shape: f32[32,4], index: 1, kind: input, shape index: {}]
  %s2 = inlined_call_operand.vmem [shape: f32[32,1], index: 2, kind: input, shape index: {}]
  %s3 = inlined_call_operand.vmem [shape: f32[64,32], index: 3, kind: input, shape index: {}]
  %s4 = inlined_call_operand.vmem [shape: f32[64,1], index: 4, kind: input, shape index: {}]
  %s5 = inlined_call_operand.vmem [shape: f32[2,64,256], index: 5, kind: output, shape index: {}]
  %s6 = sld [smem:[#allocation0]]
  $region53: #{base_mlp_backbone_forward.1} parent=0
    _
  %s8 = ssub.s32 1, %s6
  %s9 = scalar_select 0, %s8, %s6
  loop: start=0, step=1, limit=4
  $region2: #{base_mlp_backbone_forward.1} parent=0 // loop_pre_header
    _
  $region3: #{base_mlp_backbone_forward.1} parent=0 // loop_header
    %s11 = sphi 0, %s15
    %p12 = scmp.ge.s32.totalorder %s11, 4
    %s18 = sphi 0, %s30
    %s19 = sphi 0, %s26
    %s20 = sphi 0, %s18
    %s21 = sphi 0, %s19
    %s22 = sphi 0, %s20
    %s23 = sphi 0, %s21
    %s35 = sphi 0, %s37
    %s38 = sphi 0, %s35
    %s39 = sphi 0, %s38
    %s55 = sphi 0, %s39
    %s59 = sphi 0, %s59
    %s61 = sphi 0, %s59
    %s62 = sphi 0, %s61
    %s76 = sphi 0, %s62
    %s80 = sphi 0, %s80
    %s82 = sphi 0, %s80
    %s83 = sphi 0, %s82
    %s97 = sphi 0, %s83
    %s101 = sphi 0, %s101
    %s103 = sphi 0, %s101
    %s104 = sphi 0, %s103
    %s118 = sphi 0, %s104
    %s122 = sphi 0, %s122
    %s124 = sphi 0, %s122
    %s125 = sphi 0, %s124
    %s139 = sphi 0, %s125
    %s147 = sphi 0, %s149
    %s150 = sphi 0, %s147
    %s151 = sphi 0, %s150
    %s167 = sphi 0, %s151
  $region4: #{base_mlp_backbone_forward.1} parent=0 // loop_header_branch
    %14 = sbr.rel (%p12) target = $region8
  $region5: #{base_mlp_backbone_forward.1} parent=0 // loop_body
    %s16 = ssub.s32 %s11, 1
    %s17 = ssub.s32 %s11, 2
    %s24 = sadd.s32 1, %s19
    %p25 = scmp.ge.s32.totalorder %s24, 1
    %s26 = scalar_select %p25, 0, %s24
    %s27 = sadd.s32 1, %s18
    %s28 = scalar_select %p25, %s27, %s18
    %p29 = scmp.ge.s32.totalorder %s28, 2
    %s30 = scalar_select %p29, 0, %s28
    %s31 = ssub.s32 %s18, %s30
    %s32 = ssub.s32 %s19, %s26
    %s33 = sor.u32 %s31, %s32
    %p34 = scmp.eq.s32.totalorder %s33, 0
    %s36 = sadd.s32 %s35, 1
    %s37 = scalar_select %p34, %s35, %s36
    %p40 = pneg %p34
    %p41 = scmp.eq.s32.totalorder %s11, 1
    %p42 = por %p40, %p41
    %p43 = scmp.ne.s32.totalorder %s35, %s38
    %p44 = scmp.eq.s32.totalorder %s11, 0
    %p45 = por %p43, %p44
    %p46 = scmp.ne.s32.totalorder %s35, %s38
    %p47 = scmp.eq.s32.totalorder %s16, 1
    %p48 = por %p46, %p47
    %p49 = scmp.ne.s32.totalorder %s38, %s39
    %p50 = scmp.eq.s32.totalorder %s16, 0
    %p51 = por %p49, %p50
    %p52 = scmp.ne.s32.totalorder %s38, %s39
    %p53 = scmp.eq.s32.totalorder %s17, 1
    %p54 = por %p52, %p53
    %p56 = scmp.ne.s32.totalorder %s39, %s55
    %p57 = scmp.eq.s32.totalorder %s17, 0
    %p58 = por %p56, %p57
    %s60 = sadd.s32 %s59, 1
    %p63 = scmp.eq.s32.totalorder %s11, 1
    %p64 = scmp.ne.s32.totalorder %s59, %s61
    %p65 = scmp.eq.s32.totalorder %s11, 0
    %p66 = por %p64, %p65
    %p67 = scmp.ne.s32.totalorder %s59, %s61
    %p68 = scmp.eq.s32.totalorder %s16, 1
    %p69 = por %p67, %p68
    %p70 = scmp.ne.s32.totalorder %s61, %s62
    %p71 = scmp.eq.s32.totalorder %s16, 0
    %p72 = por %p70, %p71
    %p73 = scmp.ne.s32.totalorder %s61, %s62
    %p74 = scmp.eq.s32.totalorder %s17, 1
    %p75 = por %p73, %p74
    %p77 = scmp.ne.s32.totalorder %s62, %s76
    %p78 = scmp.eq.s32.totalorder %s17, 0
    %p79 = por %p77, %p78
    %s81 = sadd.s32 %s80, 1
    %p84 = scmp.eq.s32.totalorder %s11, 1
    %p85 = scmp.ne.s32.totalorder %s80, %s82
    %p86 = scmp.eq.s32.totalorder %s11, 0
    %p87 = por %p85, %p86
    %p88 = scmp.ne.s32.totalorder %s80, %s82
    %p89 = scmp.eq.s32.totalorder %s16, 1
    %p90 = por %p88, %p89
    %p91 = scmp.ne.s32.totalorder %s82, %s83
    %p92 = scmp.eq.s32.totalorder %s16, 0
    %p93 = por %p91, %p92
    %p94 = scmp.ne.s32.totalorder %s82, %s83
    %p95 = scmp.eq.s32.totalorder %s17, 1
    %p96 = por %p94, %p95
    %p98 = scmp.ne.s32.totalorder %s83, %s97
    %p99 = scmp.eq.s32.totalorder %s17, 0
    %p100 = por %p98, %p99
    %s102 = sadd.s32 %s101, 1
    %p105 = scmp.eq.s32.totalorder %s11, 1
    %p106 = scmp.ne.s32.totalorder %s101, %s103
    %p107 = scmp.eq.s32.totalorder %s11, 0
    %p108 = por %p106, %p107
    %p109 = scmp.ne.s32.totalorder %s101, %s103
    %p110 = scmp.eq.s32.totalorder %s16, 1
    %p111 = por %p109, %p110
    %p112 = scmp.ne.s32.totalorder %s103, %s104
    %p113 = scmp.eq.s32.totalorder %s16, 0
    %p114 = por %p112, %p113
    %p115 = scmp.ne.s32.totalorder %s103, %s104
    %p116 = scmp.eq.s32.totalorder %s17, 1
    %p117 = por %p115, %p116
    %p119 = scmp.ne.s32.totalorder %s104, %s118
    %p120 = scmp.eq.s32.totalorder %s17, 0
    %p121 = por %p119, %p120
    %s123 = sadd.s32 %s122, 1
    %p126 = scmp.eq.s32.totalorder %s11, 1
    %p127 = scmp.ne.s32.totalorder %s122, %s124
    %p128 = scmp.eq.s32.totalorder %s11, 0
    %p129 = por %p127, %p128
    %p130 = scmp.ne.s32.totalorder %s122, %s124
    %p131 = scmp.eq.s32.totalorder %s16, 1
    %p132 = por %p130, %p131
    %p133 = scmp.ne.s32.totalorder %s124, %s125
    %p134 = scmp.eq.s32.totalorder %s16, 0
    %p135 = por %p133, %p134
    %p136 = scmp.ne.s32.totalorder %s124, %s125
    %p137 = scmp.eq.s32.totalorder %s17, 1
    %p138 = por %p136, %p137
    %p140 = scmp.ne.s32.totalorder %s125, %s139
    %p141 = scmp.eq.s32.totalorder %s17, 0
    %p142 = por %p140, %p141
    %s143 = ssub.s32 %s18, %s30
    %s144 = ssub.s32 %s19, %s26
    %s145 = sor.u32 %s143, %s144
    %p146 = scmp.eq.s32.totalorder %s145, 0
    %s148 = sadd.s32 %s147, 1
    %s149 = scalar_select %p146, %s147, %s148
    %p152 = pneg %p146
    %p153 = scmp.eq.s32.totalorder %s11, 1
    %p154 = por %p152, %p153
    %p155 = scmp.ne.s32.totalorder %s147, %s150
    %p156 = scmp.eq.s32.totalorder %s11, 0
    %p157 = por %p155, %p156
    %p158 = scmp.ne.s32.totalorder %s147, %s150
    %p159 = scmp.eq.s32.totalorder %s16, 1
    %p160 = por %p158, %p159
    %p161 = scmp.ne.s32.totalorder %s150, %s151
    %p162 = scmp.eq.s32.totalorder %s16, 0
    %p163 = por %p161, %p162
    %p164 = scmp.ne.s32.totalorder %s150, %s151
    %p165 = scmp.eq.s32.totalorder %s17, 1
    %p166 = por %p164, %p165
    %p168 = scmp.ne.s32.totalorder %s151, %s167
    %p169 = scmp.eq.s32.totalorder %s17, 0
    %p170 = por %p168, %p169
    %p171 = scmp.le.s32.totalorder 1, %s11
    %p172 = scmp.lt.s32.totalorder %s11, 3
    %p173 = pnand %p171, %p172
    %p174 = pneg %p173
    // Predicated region
    $region9: #{base_mlp_backbone_forward.1} parent=5 // pred_check
      _
    $region10: #{base_mlp_backbone_forward.1} parent=5 // pred_check_branch
      %176 = sbr.rel (%p173) target = $region12
    $region11: #{base_mlp_backbone_forward.1} parent=5 // pred_region
      %s177 = ssub.s32 %s11, 1
      // Predicated region
      $region13: #{base_mlp_backbone_forward.1} parent=11 // pred_check
        %p178 = pneg %p72
      $region14: #{base_mlp_backbone_forward.1} parent=11 // pred_check_branch
        %180 = sbr.rel (%p178) target = $region16
      $region15: #{base_mlp_backbone_forward.1} parent=11 // pred_region
        _
      $region16: #{base_mlp_backbone_forward.1} parent=11 // pred_fallthru
        _
      // Predicated region
      $region17: #{base_mlp_backbone_forward.1} parent=11 // pred_check
        %p181 = pneg %p93
      $region18: #{base_mlp_backbone_forward.1} parent=11 // pred_check_branch
        %183 = sbr.rel (%p181) target = $region20
      $region19: #{base_mlp_backbone_forward.1} parent=11 // pred_region
        _
      $region20: #{base_mlp_backbone_forward.1} parent=11 // pred_fallthru
        _
      // Predicated region
      $region21: #{base_mlp_backbone_forward.1} parent=11 // pred_check
        %p184 = pneg %p114
      $region22: #{base_mlp_backbone_forward.1} parent=11 // pred_check_branch
        %186 = sbr.rel (%p184) target = $region24
      $region23: #{base_mlp_backbone_forward.1} parent=11 // pred_region
        _
      $region24: #{base_mlp_backbone_forward.1} parent=11 // pred_fallthru
        _
      // Predicated region
      $region25: #{base_mlp_backbone_forward.1} parent=11 // pred_check
        %p187 = pneg %p135
      $region26: #{base_mlp_backbone_forward.1} parent=11 // pred_check_branch
        %189 = sbr.rel (%p187) target = $region28
      $region27: #{base_mlp_backbone_forward.1} parent=11 // pred_region
        _
      $region28: #{base_mlp_backbone_forward.1} parent=11 // pred_fallthru
        _
    $region12: #{base_mlp_backbone_forward.1} parent=5 // pred_fallthru
      _
    %p190 = scmp.lt.s32.totalorder %s11, 2
    // Predicated region
    $region29: #{base_mlp_backbone_forward.1} parent=5 // pred_check
      %p191 = pneg %p190
    $region30: #{base_mlp_backbone_forward.1} parent=5 // pred_check_branch
      %193 = sbr.rel (%p191) target = $region32
    $region31: #{base_mlp_backbone_forward.1} parent=5 // pred_region
      // Predicated region
      $region33: #{base_mlp_backbone_forward.1} parent=31 // pred_check
        %p194 = pneg %p45
      $region34: #{base_mlp_backbone_forward.1} parent=31 // pred_check_branch
        %196 = sbr.rel (%p194) target = $region36
      $region35: #{base_mlp_backbone_forward.1} parent=31 // pred_region
        %s197 = smul.u32 2, %s19
        %p198 = scmp.lt.s32.totalorder %s18, 1
        %s199 = scalar_select %p198, %s18, 1
        %p200 = scmp.lt.s32.totalorder %s197, 1
        %s201 = scalar_select %p200, %s197, 1
        %s202 = smul.addr %s199, 2
        %s203 = sadd.s32 %s201, %s202
        %s204 = smul.addr %s203, 4
        %s205 = scalar_lea.vmem %s0, %s204
        %s206 = smul.u32 2, %s19
      $region36: #{base_mlp_backbone_forward.1} parent=31 // pred_fallthru
        _
    $region32: #{base_mlp_backbone_forward.1} parent=5 // pred_fallthru
      _
    %p207 = scmp.le.s32.totalorder 1, %s11
    %p208 = scmp.lt.s32.totalorder %s11, 3
    %p209 = pnand %p207, %p208
    %p210 = pneg %p209
    // Predicated region
    $region37: #{base_mlp_backbone_forward.1} parent=5 // pred_check
      _
    $region38: #{base_mlp_backbone_forward.1} parent=5 // pred_check_branch
      %212 = sbr.rel (%p209) target = $region40
    $region39: #{base_mlp_backbone_forward.1} parent=5 // pred_region
      %s213 = ssub.s32 %s11, 1
      %s214 = smul.u32 2, %s21
      %p215 = scmp.lt.s32.totalorder %s20, 1
      %s216 = scalar_select %p215, %s20, 1
      %p217 = scmp.lt.s32.totalorder %s214, 1
      %s218 = scalar_select %p217, %s214, 1
      %s219 = smul.addr %s216, 2
      %s220 = sadd.s32 %s218, %s219
      %s221 = smul.addr %s220, 4
      %s222 = scalar_lea.vmem %s0, %s221
      %p223 = pneg %p51
      %p224 = pneg %p48
      %p225 = pneg %p72
      %p226 = pneg %p69
      %p227 = pneg %p93
      %p228 = pneg %p90
      %p229 = pneg %p114
      %p230 = pneg %p111
      %p231 = pneg %p135
      %p232 = pneg %p132
      %p233 = pneg %p163
      %p234 = pneg %p160
      %s235 = smul.u32 2, %s21
      %p236 = scmp.lt.s32.totalorder %s20, 1
      %s237 = scalar_select %p236, %s20, 1
      %p238 = scmp.lt.s32.totalorder %s235, 1
      %s239 = scalar_select %p238, %s235, 1
      %s240 = smul.addr %s237, 16
      %s241 = sadd.s32 %s239, %s240
      %s242 = smul.addr %s241, 8
      %s243 = scalar_lea.vmem %s5, %s242
      %s244 = smul.u32 2, %s21
      %p245 = scmp.lt.s32.totalorder %s20, 1
      %s246 = scalar_select %p245, %s20, 1
      %p247 = scmp.lt.s32.totalorder %s244, 1
      %s248 = scalar_select %p247, %s244, 1
      %s249 = smul.addr %s246, 2
      %s250 = sadd.s32 %s248, %s249
      %s251 = smul.addr %s250, 4
      %s252 = scalar_lea.vmem %s0, %s251
      %s253 = smul.u32 2, %s21
      %s254 = smul.u32 2, %s21
      %p255 = scmp.lt.s32.totalorder %s20, 1
      %s256 = scalar_select %p255, %s20, 1
      %p257 = scmp.lt.s32.totalorder %s254, 1
      %s258 = scalar_select %p257, %s254, 1
      %s259 = smul.addr %s256, 16
      %s260 = sadd.s32 %s258, %s259
      %s261 = smul.addr %s260, 8
      %s262 = scalar_lea.vmem %s5, %s261
      %s263 = smul.u32 2, %s21
      %v264 = vld [vmem:[%s252] sm:$0xff]
      %v265 = vld [vmem:[%s1] sm:$0xff]
      %v266 = vld [vmem:[%s1 + $0x8] sm:$0xff]
      %v267 = vld [vmem:[%s1 + $0x10] sm:$0xff]
      %v268 = vld [vmem:[%s1 + $0x18] sm:$0xff]
      %v269 = vld [vmem:[%s2] sm:$0xff]
      %v270 = vld [vmem:[%s2 + $0x8] sm:$0xff]
      %v271 = vld [vmem:[%s2 + $0x10] sm:$0xff]
      %v272 = vld [vmem:[%s2 + $0x18] sm:$0xff]
      %274 = vset.pattern.permute.xlu0 0
      %275 = vperm.xlu0 %274, %v269
      %v276 = vpop.permute.xlu0 %275
      %279 = vset.pattern.permute.xlu0 0
      %280 = vperm.xlu0 %279, %v270
      %v281 = vpop.permute.xlu0 %280
      %284 = vset.pattern.permute.xlu0 0
      %285 = vperm.xlu0 %284, %v271
      %v286 = vpop.permute.xlu0 %285
      %289 = vset.pattern.permute.xlu0 0
      %290 = vperm.xlu0 %289, %v272
      %v291 = vpop.permute.xlu0 %290
      %v294 = vcombine.high %v264, %v264
      %vm295 = vcmask 31744
      %v297 = vsel %vm295, %v265, 0
      %v300 = vsel %vm295, %v266, 0
      %v303 = vsel %vm295, %v267, 0
      %v306 = vsel %vm295, %v268, 0
      %vm308 = vcmask 1043456
      %v309 = vsel %vm308, %v264, 0
      %v311 = vsel %vm308, %v294, 0
      %313 = vmatprep.subr.mxu0 %v311
      %314 = vmatpush1.msra.mxu0 %v309
      %315 = vmatprep.subr.mxu0 0.0
      %316 = vmatpush1.msra.mxu0 0.0
      %317 = vmatprep.subr.mxu0 0.0
      %318 = vmatpush1.msra.mxu0 0.0
      %319 = vmatprep.subr.mxu0 0.0
      %320 = vmatpush1.msra.mxu0 0.0
      %321 = vmatprep.subr.mxu0 0.0
      %322 = vmatpush1.msra.mxu0 0.0
      %323 = vmatprep.subr.mxu0 0.0
      %324 = vmatpush1.msra.mxu0 0.0
      %325 = vmatprep.subr.mxu0 0.0
      %326 = vmatpush1.msra.mxu0 0.0
      %327 = vmatprep.subr.mxu0 0.0
      %328 = vmatpush1.msra.mxu0 0.0
      %329 = vmatprep.subr.mxu0 0.0
      %330 = vmatpush1.msra.mxu0 0.0
      %331 = vmatprep.subr.mxu0 0.0
      %332 = vmatpush1.msra.mxu0 0.0
      %333 = vmatprep.subr.mxu0 0.0
      %334 = vmatpush1.msra.mxu0 0.0
      %335 = vmatprep.subr.mxu0 0.0
      %336 = vmatpush1.msra.mxu0 0.0
      %337 = vmatprep.subr.mxu0 0.0
      %338 = vmatpush1.msra.mxu0 0.0
      %339 = vmatprep.subr.mxu0 0.0
      %340 = vmatpush1.msra.mxu0 0.0
      %341 = vmatprep.subr.mxu0 0.0
      %342 = vmatpush1.msra.mxu0 0.0
      %343 = vmatprep.subr.mxu0 0.0
      %344 = vmatpush1.msra.mxu0 0.0
      %345 = vmatprep.subr.mxu0 0.0
      %346 = vmatpush1.msra.mxu0 0.0
      %347 = vmatprep.subr.mxu0 0.0
      %348 = vmatpush1.msra.mxu0 0.0
      %349 = vmatprep.subr.mxu0 0.0
      %350 = vmatpush1.msra.mxu0 0.0
      %351 = vmatprep.subr.mxu0 0.0
      %352 = vmatpush1.msra.mxu0 0.0
      %353 = vmatprep.subr.mxu0 0.0
      %354 = vmatpush1.msra.mxu0 0.0
      %355 = vmatprep.subr.mxu0 0.0
      %356 = vmatpush1.msra.mxu0 0.0
      %357 = vmatprep.subr.mxu0 0.0
      %358 = vmatpush1.msra.mxu0 0.0
      %359 = vmatprep.subr.mxu0 0.0
      %360 = vmatpush1.msra.mxu0 0.0
      %361 = vmatprep.subr.mxu0 0.0
      %362 = vmatpush1.msra.mxu0 0.0
      %363 = vmatprep.subr.mxu0 0.0
      %364 = vmatpush1.msra.mxu0 0.0
      %365 = vmatprep.subr.mxu0 0.0
      %366 = vmatpush1.msra.mxu0 0.0
      %367 = vmatprep.subr.mxu0 0.0
      %368 = vmatpush1.msra.mxu0 0.0
      %369 = vmatprep.subr.mxu0 0.0
      %370 = vmatpush1.msra.mxu0 0.0
      %371 = vmatprep.subr.mxu0 0.0
      %372 = vmatpush1.msra.mxu0 0.0
      %373 = vmatprep.subr.mxu0 0.0
      %374 = vmatpush1.msra.mxu0 0.0
      %375 = vmatprep.subr.mxu0 0.0
      %376 = vmatpush1.msra.mxu0 0.0
      %377 = vmatprep.mubr.f32.mxu0 0.0
      %378 = vmatmul.mubr.f32.gmra.mrb[0].mxu0 %v297
      %v379 = vpop.f32.mrb[0].mxu0
      %v380 = vadd.f32 %v276, %v379
      %v381 = vpop.f32.mrb[0].mxu0
      %v382 = vadd.f32 %v276, %v381
      %383 = vmatprep.mubr.f32.mxu0 0.0
      %384 = vmatmul.mubr.f32.gmra.mrb[0].mxu0 %v300
      %v385 = vpop.f32.mrb[0].mxu0
      %v386 = vadd.f32 %v281, %v385
      %v387 = vpop.f32.mrb[0].mxu0
      %v388 = vadd.f32 %v281, %v387
      %389 = vmatprep.mubr.f32.mxu0 0.0
      %390 = vmatmul.mubr.f32.gmra.mrb[0].mxu0 %v303
      %v391 = vpop.f32.mrb[0].mxu0
      %v392 = vadd.f32 %v286, %v391
      %v393 = vpop.f32.mrb[0].mxu0
      %v394 = vadd.f32 %v286, %v393
      %395 = vmatprep.mubr.f32.mxu0 0.0
      %396 = vmatmul.mubr.f32.gmra.mrb[0].mxu0 %v306
      %v397 = vpop.f32.mrb[0].mxu0
      %v398 = vadd.f32 %v291, %v397
      %v399 = vpop.f32.mrb[0].mxu0
      %v400 = vadd.f32 %v291, %v399
      %401 = vdwg.mxu0
      %v402 = vmax.f32 %v380, 0.0
      %v403 = vmax.f32 %v382, 0.0
      %v404 = vmax.f32 %v386, 0.0
      %v405 = vmax.f32 %v388, 0.0
      %v406 = vmax.f32 %v392, 0.0
      %v407 = vmax.f32 %v394, 0.0
      %v408 = vmax.f32 %v398, 0.0
      %v409 = vmax.f32 %v400, 0.0
      %v410 = vld [vmem:[%s3] sm:$0xff]
      %v411 = vld [vmem:[%s3 + $0x8] sm:$0xff]
      %v412 = vld [vmem:[%s3 + $0x10] sm:$0xff]
      %v413 = vld [vmem:[%s3 + $0x18] sm:$0xff]
      %v414 = vld [vmem:[%s3 + $0x20] sm:$0xff]
      %v415 = vld [vmem:[%s3 + $0x28] sm:$0xff]
      %v416 = vld [vmem:[%s3 + $0x30] sm:$0xff]
      %v417 = vld [vmem:[%s3 + $0x38] sm:$0xff]
      %v418 = vld [vmem:[%s4] sm:$0xff]
      %v419 = vld [vmem:[%s4 + $0x8] sm:$0xff]
      %v420 = vld [vmem:[%s4 + $0x10] sm:$0xff]
      %v421 = vld [vmem:[%s4 + $0x18] sm:$0xff]
      %v422 = vld [vmem:[%s4 + $0x20] sm:$0xff]
      %v423 = vld [vmem:[%s4 + $0x28] sm:$0xff]
      %v424 = vld [vmem:[%s4 + $0x30] sm:$0xff]
      %v425 = vld [vmem:[%s4 + $0x38] sm:$0xff]
      %427 = vset.pattern.permute.xlu0 0
      %428 = vperm.xlu0 %427, %v418
      %v429 = vpop.permute.xlu0 %428
      %432 = vset.pattern.permute.xlu0 0
      %433 = vperm.xlu0 %432, %v419
      %v434 = vpop.permute.xlu0 %433
      %437 = vset.pattern.permute.xlu0 0
      %438 = vperm.xlu0 %437, %v420
      %v439 = vpop.permute.xlu0 %438
      %442 = vset.pattern.permute.xlu0 0
      %443 = vperm.xlu0 %442, %v421
      %v444 = vpop.permute.xlu0 %443
      %447 = vset.pattern.permute.xlu0 0
      %448 = vperm.xlu0 %447, %v422
      %v449 = vpop.permute.xlu0 %448
      %452 = vset.pattern.permute.xlu0 0
      %453 = vperm.xlu0 %452, %v423
      %v454 = vpop.permute.xlu0 %453
      %457 = vset.pattern.permute.xlu0 0
      %458 = vperm.xlu0 %457, %v424
      %v459 = vpop.permute.xlu0 %458
      %462 = vset.pattern.permute.xlu0 0
      %463 = vperm.xlu0 %462, %v425
      %v464 = vpop.permute.xlu0 %463
      %vm466 = vcmask 261120
      %v468 = vsel %vm466, %v410, 0
      %v471 = vsel %vm466, %v411, 0
      %v474 = vsel %vm466, %v412, 0
      %v477 = vsel %vm466, %v413, 0
      %v480 = vsel %vm466, %v414, 0
      %v483 = vsel %vm466, %v415, 0
      %v486 = vsel %vm466, %v416, 0
      %v489 = vsel %vm466, %v417, 0
      %491 = vmatprep.subr.mxu0 %v403
      %492 = vmatpush1.msra.mxu0 %v402
      %493 = vmatprep.subr.mxu0 %v405
      %494 = vmatpush1.msra.mxu0 %v404
      %495 = vmatprep.subr.mxu0 %v407
      %496 = vmatpush1.msra.mxu0 %v406
      %497 = vmatprep.subr.mxu0 %v409
      %498 = vmatpush1.msra.mxu0 %v408
      %499 = vmatprep.subr.mxu0 0.0
      %500 = vmatpush1.msra.mxu0 0.0
      %501 = vmatprep.subr.mxu0 0.0
      %502 = vmatpush1.msra.mxu0 0.0
      %503 = vmatprep.subr.mxu0 0.0
      %504 = vmatpush1.msra.mxu0 0.0
      %505 = vmatprep.subr.mxu0 0.0
      %506 = vmatpush1.msra.mxu0 0.0
      %507 = vmatprep.subr.mxu0 0.0
      %508 = vmatpush1.msra.mxu0 0.0
      %509 = vmatprep.subr.mxu0 0.0
      %510 = vmatpush1.msra.mxu0 0.0
      %511 = vmatprep.subr.mxu0 0.0
      %512 = vmatpush1.msra.mxu0 0.0
      %513 = vmatprep.subr.mxu0 0.0
      %514 = vmatpush1.msra.mxu0 0.0
      %515 = vmatprep.subr.mxu0 0.0
      %516 = vmatpush1.msra.mxu0 0.0
      %517 = vmatprep.subr.mxu0 0.0
      %518 = vmatpush1.msra.mxu0 0.0
      %519 = vmatprep.subr.mxu0 0.0
      %520 = vmatpush1.msra.mxu0 0.0
      %521 = vmatprep.subr.mxu0 0.0
      %522 = vmatpush1.msra.mxu0 0.0
      %523 = vmatprep.subr.mxu0 0.0
      %524 = vmatpush1.msra.mxu0 0.0
      %525 = vmatprep.subr.mxu0 0.0
      %526 = vmatpush1.msra.mxu0 0.0
      %527 = vmatprep.subr.mxu0 0.0
      %528 = vmatpush1.msra.mxu0 0.0
      %529 = vmatprep.subr.mxu0 0.0
      %530 = vmatpush1.msra.mxu0 0.0
      %531 = vmatprep.subr.mxu0 0.0
      %532 = vmatpush1.msra.mxu0 0.0
      %533 = vmatprep.subr.mxu0 0.0
      %534 = vmatpush1.msra.mxu0 0.0
      %535 = vmatprep.subr.mxu0 0.0
      %536 = vmatpush1.msra.mxu0 0.0
      %537 = vmatprep.subr.mxu0 0.0
      %538 = vmatpush1.msra.mxu0 0.0
      %539 = vmatprep.subr.mxu0 0.0
      %540 = vmatpush1.msra.mxu0 0.0
      %541 = vmatprep.subr.mxu0 0.0
      %542 = vmatpush1.msra.mxu0 0.0
      %543 = vmatprep.subr.mxu0 0.0
      %544 = vmatpush1.msra.mxu0 0.0
      %545 = vmatprep.subr.mxu0 0.0
      %546 = vmatpush1.msra.mxu0 0.0
      %547 = vmatprep.subr.mxu0 0.0
      %548 = vmatpush1.msra.mxu0 0.0
      %549 = vmatprep.subr.mxu0 0.0
      %550 = vmatpush1.msra.mxu0 0.0
      %551 = vmatprep.subr.mxu0 0.0
      %552 = vmatpush1.msra.mxu0 0.0
      %553 = vmatprep.subr.mxu0 0.0
      %554 = vmatpush1.msra.mxu0 0.0
      %555 = vmatprep.mubr.f32.mxu0 0.0
      %556 = vmatmul.mubr.f32.gmra.mrb[0].mxu0 %v468
      %v557 = vpop.f32.mrb[0].mxu0
      %v558 = vadd.f32 %v429, %v557
      %v559 = vpop.f32.mrb[0].mxu0
      %v560 = vadd.f32 %v429, %v559
      %561 = vmatprep.mubr.f32.mxu0 0.0
      %562 = vmatmul.mubr.f32.gmra.mrb[0].mxu0 %v471
      %v563 = vpop.f32.mrb[0].mxu0
      %v564 = vadd.f32 %v434, %v563
      %v565 = vpop.f32.mrb[0].mxu0
      %v566 = vadd.f32 %v434, %v565
      %567 = vmatprep.mubr.f32.mxu0 0.0
      %568 = vmatmul.mubr.f32.gmra.mrb[0].mxu0 %v474
      %v569 = vpop.f32.mrb[0].mxu0
      %v570 = vadd.f32 %v439, %v569
      %v571 = vpop.f32.mrb[0].mxu0
      %v572 = vadd.f32 %v439, %v571
      %573 = vmatprep.mubr.f32.mxu0 0.0
      %574 = vmatmul.mubr.f32.gmra.mrb[0].mxu0 %v477
      %v575 = vpop.f32.mrb[0].mxu0
      %v576 = vadd.f32 %v444, %v575
      %v577 = vpop.f32.mrb[0].mxu0
      %v578 = vadd.f32 %v444, %v577
      %579 = vmatprep.mubr.f32.mxu0 0.0
      %580 = vmatmul.mubr.f32.gmra.mrb[0].mxu0 %v480
      %v581 = vpop.f32.mrb[0].mxu0
      %v582 = vadd.f32 %v449, %v581
      %v583 = vpop.f32.mrb[0].mxu0
      %v584 = vadd.f32 %v449, %v583
      %585 = vmatprep.mubr.f32.mxu0 0.0
      %586 = vmatmul.mubr.f32.gmra.mrb[0].mxu0 %v483
      %v587 = vpop.f32.mrb[0].mxu0
      %v588 = vadd.f32 %v454, %v587
      %v589 = vpop.f32.mrb[0].mxu0
      %v590 = vadd.f32 %v454, %v589
      %591 = vmatprep.mubr.f32.mxu0 0.0
      %592 = vmatmul.mubr.f32.gmra.mrb[0].mxu0 %v486
      %v593 = vpop.f32.mrb[0].mxu0
      %v594 = vadd.f32 %v459, %v593
      %v595 = vpop.f32.mrb[0].mxu0
      %v596 = vadd.f32 %v459, %v595
      %597 = vmatprep.mubr.f32.mxu0 0.0
      %598 = vmatmul.mubr.f32.gmra.mrb[0].mxu0 %v489
      %v599 = vpop.f32.mrb[0].mxu0
      %v600 = vadd.f32 %v464, %v599
      %v601 = vpop.f32.mrb[0].mxu0
      %v602 = vadd.f32 %v464, %v601
      %603 = vdwg.mxu0
      %v604 = vmax.f32 %v558, 0.0
      %v605 = vmax.f32 %v560, 0.0
      %v606 = vmax.f32 %v564, 0.0
      %v607 = vmax.f32 %v566, 0.0
      %v608 = vmax.f32 %v570, 0.0
      %v609 = vmax.f32 %v572, 0.0
      %v610 = vmax.f32 %v576, 0.0
      %v611 = vmax.f32 %v578, 0.0
      %v612 = vmax.f32 %v582, 0.0
      %v613 = vmax.f32 %v584, 0.0
      %v614 = vmax.f32 %v588, 0.0
      %v615 = vmax.f32 %v590, 0.0
      %v616 = vmax.f32 %v594, 0.0
      %v617 = vmax.f32 %v596, 0.0
      %v618 = vmax.f32 %v600, 0.0
      %v619 = vmax.f32 %v602, 0.0
      %620 = vst [vmem:[%s262] sm:$0xff] %v604
      %621 = vst [vmem:[%s262 + $0x8] sm:$0xff] %v605
      %622 = vst [vmem:[%s262 + $0x10] sm:$0xff] %v606
      %623 = vst [vmem:[%s262 + $0x18] sm:$0xff] %v607
      %624 = vst [vmem:[%s262 + $0x20] sm:$0xff] %v608
      %625 = vst [vmem:[%s262 + $0x28] sm:$0xff] %v609
      %626 = vst [vmem:[%s262 + $0x30] sm:$0xff] %v610
      %627 = vst [vmem:[%s262 + $0x38] sm:$0xff] %v611
      %628 = vst [vmem:[%s262 + $0x40] sm:$0xff] %v612
      %629 = vst [vmem:[%s262 + $0x48] sm:$0xff] %v613
      %630 = vst [vmem:[%s262 + $0x50] sm:$0xff] %v614
      %631 = vst [vmem:[%s262 + $0x58] sm:$0xff] %v615
      %632 = vst [vmem:[%s262 + $0x60] sm:$0xff] %v616
      %633 = vst [vmem:[%s262 + $0x68] sm:$0xff] %v617
      %634 = vst [vmem:[%s262 + $0x70] sm:$0xff] %v618
      %635 = vst [vmem:[%s262 + $0x78] sm:$0xff] %v619
      %s636 = smul.u32 2, %s21
      %p637 = scmp.lt.s32.totalorder %s20, 1
      %s638 = scalar_select %p637, %s20, 1
      %p639 = scmp.lt.s32.totalorder %s636, 1
      %s640 = scalar_select %p639, %s636, 1
      %s641 = smul.addr %s638, 16
      %s642 = sadd.s32 %s640, %s641
      %s643 = smul.addr %s642, 8
      %s644 = scalar_lea.vmem %s5, %s643
      // Predicated region
      $region41: #{base_mlp_backbone_forward.1} parent=39 // pred_check
        %p645 = pneg %p160
      $region42: #{base_mlp_backbone_forward.1} parent=39 // pred_check_branch
        %647 = sbr.rel (%p645) target = $region44
      $region43: #{base_mlp_backbone_forward.1} parent=39 // pred_region
        %s648 = smul.u32 2, %s21
      $region44: #{base_mlp_backbone_forward.1} parent=39 // pred_fallthru
        _
    $region40: #{base_mlp_backbone_forward.1} parent=5 // pred_fallthru
      _
    %p649 = scmp.le.s32.totalorder 2, %s11
    // Predicated region
    $region45: #{base_mlp_backbone_forward.1} parent=5 // pred_check
      %p650 = pneg %p649
    $region46: #{base_mlp_backbone_forward.1} parent=5 // pred_check_branch
      %652 = sbr.rel (%p650) target = $region48
    $region47: #{base_mlp_backbone_forward.1} parent=5 // pred_region
      %s653 = ssub.s32 %s11, 2
      // Predicated region
      $region49: #{base_mlp_backbone_forward.1} parent=47 // pred_check
        %p654 = pneg %p166
      $region50: #{base_mlp_backbone_forward.1} parent=47 // pred_check_branch
        %656 = sbr.rel (%p654) target = $region52
      $region51: #{base_mlp_backbone_forward.1} parent=47 // pred_region
        %s657 = smul.u32 2, %s23
        %p658 = scmp.lt.s32.totalorder %s22, 1
        %s659 = scalar_select %p658, %s22, 1
        %p660 = scmp.lt.s32.totalorder %s657, 1
        %s661 = scalar_select %p660, %s657, 1
        %s662 = smul.addr %s659, 16
        %s663 = sadd.s32 %s661, %s662
        %s664 = smul.addr %s663, 8
        %s665 = scalar_lea.vmem %s5, %s664
      $region52: #{base_mlp_backbone_forward.1} parent=47 // pred_fallthru
        _
    $region48: #{base_mlp_backbone_forward.1} parent=5 // pred_fallthru
      _
  $region6: #{base_mlp_backbone_forward.1} parent=0 // loop_footer
    %s15 = sadd.s32 1, %s11
  $region7: #{base_mlp_backbone_forward.1} parent=0 // loop_footer_branch
    %10 = sbr.rel target = $region3
  $region8: #{base_mlp_backbone_forward.1} parent=0 // loop_exit
    _

</llo_original>
